<compile_context>
chip_gen: v5e
topology: v5e:2x2
jax: 0.10.0
libtpu: 0.0.40
codegen_flags: <defaults>
</compile_context>

<pallas_src>
import functools

import jax
import jax.numpy as jnp
from jax import lax
from jax.experimental import pallas as pl
from jax.experimental.pallas import tpu as pltpu


# ------------------------------- main kernel ---------------------------------

def _svd_head_kernel(se_t_ref, cat_ref, sa_ref, sb_ref, src_t_ref, sx_ref,
                     tgt_ref, st_ref, nit_ref, corr_ref, small_ref,
                     *, n_src, alpha_factor, eps):
    """One grid step = Bt batches, fully resident in VMEM.

    se_t_ref : (Bt, N, E)    bf16  source embedding, transposed
    cat_ref  : (Bt, E, N+M)  bf16  -2 * [src_embedding | tgt_embedding]
    sa_ref   : (Bt, N, 1)    f32   ||se_n||^2     (from the same bf16 values)
    sb_ref   : (Bt, 1, N+M)  f32   ||cat_k||^2    (from the same bf16 values)
    src_t_ref: (Bt, N, 3)    f32
    sx_ref   : (Bt, N, 1)    f32   ||src_n||^2
    tgt_ref  : (Bt, 3, M)    f32
    st_ref   : (Bt, 1, M)    f32   ||tgt_m||^2
    nit_ref  : (Bt, 1, 1)    f32   -1/T  (T_net temperature, already /2**(iter-1))
    corr_ref : (Bt, 3, N)    f32   src_corr (lane-dense)
    small_ref: (Bt, 5, 3)    f32   rows 0..2 = H, row 3 = swm^T, row 4 = scwm^T
    """
    f32 = jnp.float32
    bdims = ((0,), (0,))

    se_t = se_t_ref[...]
    cat_s = cat_ref[...]
    sa_col = sa_ref[...]
    sb_row = sb_ref[...]
    src_t = src_t_ref[...]
    sx_col = sx_ref[...]
    tgt = tgt_ref[...]
    st_row = st_ref[...]
    neg_inv_T = nit_ref[...]                                        # (Bt,1,1)

    # ---- fused Gram matmul on the MXU (bf16 in, f32 acc); -2 pre-folded -----
    g_all = lax.dot_general(se_t, cat_s, (((2,), (1,)), bdims),
                            preferred_element_type=f32)             # (Bt,N,N+M)
    d_all = jnp.maximum(sa_col + sb_row + g_all, 0.0)               # (Bt,N,N+M)
    nm = d_all.shape[2]

    # ---- alpha heuristic from the src-src columns (batch-free mask) ---------
    # TODO(synk): exact DeepBBS guess_best_alpha heuristic (mean vs median of
    # the NN distance) inferred; mean of nearest-neighbour squared distance used.
    col = lax.broadcasted_iota(jnp.int32, (1, n_src, nm), 2)
    row = lax.broadcasted_iota(jnp.int32, (1, n_src, nm), 1)
    invalid = (col >= n_src) | (col == row)                         # (1,N,N+M)
    nn_d = jnp.min(jnp.where(invalid, f32(1e30), d_all),
                   axis=2, keepdims=True)                           # (Bt,N,1)
    alpha = jnp.mean(nn_d, axis=1, keepdims=True)                   # (Bt,1,1)
    neg_inv_t_soft = -pl.reciprocal(alpha_factor * alpha + eps, approx=True)

    # ---- soft best-buddies scores: single exp (s <= 0 => exp <= 1) ----------
    s = d_all[:, :, n_src:] * neg_inv_t_soft                        # (Bt,N,M)
    e = jnp.exp(s)
    zr_inv = pl.reciprocal(jnp.sum(e, axis=2, keepdims=True) + eps, approx=True)
    zc_inv = pl.reciprocal(jnp.sum(e, axis=1, keepdims=True) + eps, approx=True)
    scores = (e * zr_inv) * (e * zc_inv)                            # (Bt,N,M)

    # ---- correspondences (row-normalised scores @ tgt) ----------------------
    row_inv = pl.reciprocal(jnp.sum(scores, axis=2, keepdims=True) + eps,
                            approx=True)
    scores_norm = scores * row_inv                                  # (Bt,N,M)
    # (N,3) orientation for the moments / H (MXU, contract-last-dims):
    corr_t = lax.dot_general(scores_norm, tgt, (((2,), (2,)), bdims),
                             preferred_element_type=f32)            # (Bt,N,3)
    # (3,N) lane-dense orientation for the HBM store (tiny 3-wide matmul):
    corr_d = lax.dot_general(tgt, scores_norm, (((2,), (2,)), bdims),
                             preferred_element_type=f32)            # (Bt,3,N)

    # ---- gamma weighting from xyz squared distances --------------------------
    g_xyz = lax.dot_general(src_t, tgt, (((2,), (1,)), bdims),
                            preferred_element_type=f32)             # (Bt,N,M)
    d_xyz = jnp.maximum(sx_col + st_row - 2.0 * g_xyz, 0.0)         # (Bt,N,M)
    w = scores * jnp.exp(d_xyz * neg_inv_T)                         # (Bt,N,M)
    gamma = jnp.sum(w, axis=2, keepdims=True)                       # (Bt,N,1)
    g_inv = pl.reciprocal(jnp.sum(gamma, axis=1, keepdims=True) + eps,
                          approx=True)                              # (Bt,1,1)

    # ---- weighted means, centering, cross-covariance H -----------------------
    swm_t = jnp.sum(src_t * gamma, axis=1, keepdims=True) * g_inv       # (Bt,1,3)
    scwm_t = jnp.sum(corr_t * gamma, axis=1, keepdims=True) * g_inv     # (Bt,1,3)
    src_c = src_t - swm_t                                               # (Bt,N,3)
    corr_c = corr_t - scwm_t                                            # (Bt,N,3)
    a_w = src_c * gamma                                                 # (Bt,N,3)
    h = lax.dot_general(a_w, corr_c, (((1,), (1,)), bdims),
                        preferred_element_type=f32)                     # (Bt,3,3)
    r3 = lax.broadcasted_iota(jnp.int32, (1, 3, 3), 1)
    c3 = lax.broadcasted_iota(jnp.int32, (1, 3, 3), 2)
    diag123 = jnp.where(r3 == c3, (c3 + 1).astype(f32), 0.0)            # (1,3,3)
    h = h + eps * diag123

    corr_ref[...] = corr_d
    small_ref[:, 0:3, :] = h
    small_ref[:, 3:4, :] = swm_t
    small_ref[:, 4:5, :] = scwm_t


# --------------------- VMEM-aware block-batch selection -----------------------

def _vmem_capacity_bytes():
    try:
        return int(pltpu.get_tpu_info().vmem_capacity_bytes)
    except Exception:
        return 64 * 1024 * 1024          # conservative (v7x per-TC)


def _per_batch_vmem_bytes(e, n, m):
    """Rough, conservative per-batch footprint (inputs double-buffered + live slabs)."""
    nm = n + m
    lane = 128
    bf16_in = 2 * (n * e + e * nm)                                  # se^T, -2*[se|te]
    f32_in = 4 * (2 * n * lane + 8 * nm + n * 3 + 8 * m + 8 * lane)  # padded vectors
    outs = 4 * (3 * n + 5 * lane)
    streams = 2 * (bf16_in + f32_in + outs)                          # double-buffered
    d_region = 4 * 2 * n * nm + n * nm                               # d_all + masked copy + mask
    nm_slabs = 4 * 6 * n * m                                         # e/scores/scores_norm/g_xyz/w/slice
    vectors = 4 * (8 * n * 3 + 6 * n * lane + 4 * 8 * m)
    return streams + d_region + nm_slabs + vectors


def _choose_block_batch(b, e, n, m, budget_bytes):
    """Largest divisor of B that fits the budget, keeping >= 2 grid steps (megacore)."""
    per_batch = max(1, _per_batch_vmem_bytes(e, n, m))
    max_bt = max(1, b // 2) if b >= 2 else 1
    bt = 1
    for cand in range(1, max_bt + 1):
        if b % cand == 0 and cand * per_batch <= budget_bytes:
            bt = cand
    return bt


def svd_head_main_kernel(se_t, cat_scaled, sa_col, sb_row, src_t, sx_col,
                         tgt, st_row, neg_inv_T, alpha_factor, eps, n_src):
    B, N, E = se_t.shape
    NM = cat_scaled.shape[2]
    M = NM - n_src

    cap = _vmem_capacity_bytes()
    vmem_limit = int(min(max(0.70 * cap, 24 * 1024 * 1024), 100 * 1024 * 1024))
    Bt = _choose_block_batch(B, E, N, M, budget_bytes=int(0.6 * vmem_limit))

    kernel = functools.partial(_svd_head_kernel, n_src=n_src,
                               alpha_factor=float(alpha_factor), eps=float(eps))
    grid_spec = pltpu.PrefetchScalarGridSpec(
        num_scalar_prefetch=0,
        grid=(B // Bt,),
        in_specs=[
            pl.BlockSpec((Bt, N, E), lambda b: (b, 0, 0)),     # se^T         (bf16)
            pl.BlockSpec((Bt, E, NM), lambda b: (b, 0, 0)),    # -2*[se|te]   (bf16)
            pl.BlockSpec((Bt, N, 1), lambda b: (b, 0, 0)),     # ||se||^2
            pl.BlockSpec((Bt, 1, NM), lambda b: (b, 0, 0)),    # ||cat||^2
            pl.BlockSpec((Bt, N, 3), lambda b: (b, 0, 0)),     # src^T
            pl.BlockSpec((Bt, N, 1), lambda b: (b, 0, 0)),     # ||src||^2
            pl.BlockSpec((Bt, 3, M), lambda b: (b, 0, 0)),     # tgt
            pl.BlockSpec((Bt, 1, M), lambda b: (b, 0, 0)),     # ||tgt||^2
            pl.BlockSpec((Bt, 1, 1), lambda b: (b, 0, 0)),     # -1/T
        ],
        out_specs=[
            pl.BlockSpec((Bt, 3, N), lambda b: (b, 0, 0)),     # src_corr (lane-dense)
            pl.BlockSpec((Bt, 5, 3), lambda b: (b, 0, 0)),     # [H; swm^T; scwm^T]
        ],
    )
    out_shape = (
        jax.ShapeDtypeStruct((B, 3, N), jnp.float32),
        jax.ShapeDtypeStruct((B, 5, 3), jnp.float32),
    )
    return pl.pallas_call(
        kernel,
        out_shape=out_shape,
        grid_spec=grid_spec,
        compiler_params=pltpu.CompilerParams(
            dimension_semantics=("parallel",),        # batch axis independent -> megacore
            vmem_limit_bytes=vmem_limit),             # generation-aware budget
    )(se_t, cat_scaled, sa_col, sb_row, src_t, sx_col, tgt, st_row, neg_inv_T)


# ----------------- T_net MLP kernel (BatchNorm folded in) --------------------

def _tnet_kernel(x_ref, w1_ref, b1_ref, w2_ref, b2_ref, w3_ref, b3_ref,
                 w4_ref, b4_ref, out_ref):
    x = x_ref[...]                                                  # (B, E)
    h = jnp.maximum(jnp.dot(x, w1_ref[...],
                            preferred_element_type=jnp.float32) + b1_ref[...], 0.0)
    h = jnp.maximum(jnp.dot(h, w2_ref[...],
                            preferred_element_type=jnp.float32) + b2_ref[...], 0.0)
    h = jnp.maximum(jnp.dot(h, w3_ref[...],
                            preferred_element_type=jnp.float32) + b3_ref[...], 0.0)
    o = jnp.maximum(jnp.dot(h, w4_ref[...],
                            preferred_element_type=jnp.float32) + b4_ref[...], 0.0)
    out_ref[...] = jnp.clip(o, 0.01, 100.0)   # torch.clamp(T_net(.), 0.01, 100)


def tnet_kernel(x, params):
    B = x.shape[0]
    return pl.pallas_call(
        _tnet_kernel,
        out_shape=jax.ShapeDtypeStruct((B, 1), jnp.float32),
    )(x, *params)


def init_tnet_params(key, emb_dims):
    """Deterministic T_net parameters; eval-mode BatchNorm1d folded into Linears."""
    def linear(k, fan_in, fan_out):
        kw, kb = jax.random.split(k)
        w = 0.1 * jax.random.normal(kw, (fan_in, fan_out), jnp.float32)
        b = 0.05 * jax.random.normal(kb, (1, fan_out), jnp.float32)
        return w, b

    def bn(k, dim):
        k1, k2, k3, k4 = jax.random.split(k, 4)
        gamma = 1.0 + 0.1 * jax.random.normal(k1, (dim,), jnp.float32)
        beta = 0.1 * jax.random.normal(k2, (dim,), jnp.float32)
        rmean = 0.1 * jax.random.normal(k3, (dim,), jnp.float32)
        rvar = 0.5 + jax.random.uniform(k4, (dim,), jnp.float32)
        return gamma, beta, rmean, rvar

    def fold(w, b, gamma, beta, rmean, rvar, bn_eps=1e-5):
        scale = gamma / jnp.sqrt(rvar + bn_eps)
        return (w * scale[None, :],
                (b - rmean[None, :]) * scale[None, :] + beta[None, :])

    ks = jax.random.split(key, 7)
    w1, b1 = fold(*linear(ks[0], emb_dims, 128), *bn(ks[1], 128))
    w2, b2 = fold(*linear(ks[2], 128, 128), *bn(ks[3], 128))
    w3, b3 = fold(*linear(ks[4], 128, 128), *bn(ks[5], 128))
    w4, b4 = linear(ks[6], 128, 1)
    return (w1, b1, w2, b2, w3, b3, w4, b4)


# ------------------------------ full forward ---------------------------------

def svd_head_forward(params, src_embedding, tgt_embedding, src, tgt, iteration,
                     alpha_factor=1.0, eps=1e-8):
    f32 = jnp.float32
    B, E, N = src_embedding.shape
    M = tgt_embedding.shape[2]

    # T_net input: |mean_n(src_embedding) - mean_n(tgt_embedding)| -> (B, E)
    x = jnp.abs(jnp.mean(src_embedding, axis=2) - jnp.mean(tgt_embedding, axis=2))
    T = tnet_kernel(x, params)                      # (B,1), clamped to [0.01, 100]
    T = T / (2.0 ** (iteration - 1))
    neg_inv_T = (-1.0 / T).reshape(B, 1, 1).astype(f32)   # exact divide in XLA

    # Layout plumbing + norm precompute done once in XLA so the kernel's matmuls
    # are MXU-native and no full-slab upcasts/reductions happen in VMEM.
    se_t_bf = jnp.transpose(src_embedding, (0, 2, 1)).astype(jnp.bfloat16)   # (B,N,E)
    cat_bf = jnp.concatenate([src_embedding, tgt_embedding],
                             axis=2).astype(jnp.bfloat16)                    # (B,E,N+M)
    # Fold the -2 of the Gram term into the weights (power-of-two scale, exact).
    cat_scaled_bf = (cat_bf.astype(f32) * (-2.0)).astype(jnp.bfloat16)

    sa_col = jnp.sum(jnp.square(se_t_bf.astype(f32)), axis=2, keepdims=True)  # (B,N,1)
    sb_row = jnp.sum(jnp.square(cat_bf.astype(f32)), axis=1, keepdims=True)   # (B,1,N+M)

    src_t = jnp.transpose(src, (0, 2, 1)).astype(f32)                         # (B,N,3)
    sx_col = jnp.sum(src_t * src_t, axis=2, keepdims=True)                    # (B,N,1)
    tgt_f = tgt.astype(f32)                                                   # (B,3,M)
    st_row = jnp.sum(tgt_f * tgt_f, axis=1, keepdims=True)                    # (B,1,M)

    src_corr, small = svd_head_main_kernel(
        se_t_bf, cat_scaled_bf, sa_col, sb_row, src_t, sx_col,
        tgt_f, st_row, neg_inv_T, alpha_factor, eps, N)

    H = small[:, 0:3, :]                                            # (B,3,3)
    swm = small[:, 3, :][:, :, None]                                # (B,3,1)
    scwm = small[:, 4, :][:, :, None]                               # (B,3,1)

    # 3x3 SVD / det / reflection fix-up: no Pallas SVD primitive -> JAX glue.
    U, S, Vh = jnp.linalg.svd(H)                   # H = U diag(S) Vh
    V = jnp.swapaxes(Vh, -1, -2)
    Ut = jnp.swapaxes(U, -1, -2)
    R0 = jnp.matmul(V, Ut)
    det = jnp.linalg.det(R0)
    reflect = jnp.diag(jnp.array([1.0, 1.0, -1.0], f32))
    V = jnp.where((det < 0.0)[:, None, None], jnp.matmul(V, reflect), V)
    R = jnp.matmul(V, Ut)
    t = jnp.matmul(-R, swm) + scwm                 # (B, 3, 1)
    return R, t.reshape(B, 3), src_corr


# ---------------------------------- main --------------------------------------

if __name__ == "__main__":
    key = jax.random.PRNGKey(0)
    B, E, N, M = 2, 32, 16, 16                     # batch, emb_dims, #src, #tgt points
    k0, k1, k2, k3, k4 = jax.random.split(key, 5)
    src_embedding = jax.random.normal(k0, (B, E, N), jnp.float32)
    tgt_embedding = jax.random.normal(k1, (B, E, M), jnp.float32)
    src = jax.random.normal(k2, (B, 3, N), jnp.float32)
    tgt = jax.random.normal(k3, (B, 3, M), jnp.float32)
    params = init_tnet_params(k4, E)

    R, t, src_corr = svd_head_forward(params, src_embedding, tgt_embedding,
                                      src, tgt, iteration=1,
                                      alpha_factor=1.0, eps=1e-8)
    jax.block_until_ready((R, t, src_corr))
    assert R.shape == (B, 3, 3)
    assert t.shape == (B, 3)
    assert src_corr.shape == (B, 3, N)
    print("KERNEL_OK")
</pallas_src>

<mosaic_0001>
module attributes {stable_mosaic.version = 11 : i64} {
  func.func @_tnet_kernel(%arg0: memref<2x32xf32, #tpu.memory_space<vmem>>, %arg1: memref<32x128xf32, #tpu.memory_space<vmem>>, %arg2: memref<1x128xf32, #tpu.memory_space<vmem>>, %arg3: memref<128x128xf32, #tpu.memory_space<vmem>>, %arg4: memref<1x128xf32, #tpu.memory_space<vmem>>, %arg5: memref<128x128xf32, #tpu.memory_space<vmem>>, %arg6: memref<1x128xf32, #tpu.memory_space<vmem>>, %arg7: memref<128x1xf32, #tpu.memory_space<vmem>>, %arg8: memref<1x1xf32, #tpu.memory_space<vmem>>, %arg9: memref<2x1xf32, #tpu.memory_space<vmem>>) attributes {dimension_semantics = [], scalar_prefetch = 0 : i64, scratch_operands = 0 : i64, tpu.core_type = #tpu.core_type<tc>} {
    %c0 = arith.constant 0 : index
    %c0_0 = arith.constant 0 : index
    %0 = vector.load %arg0[%c0, %c0_0] : memref<2x32xf32, #tpu.memory_space<vmem>>, vector<2x32xf32>
    %c0_1 = arith.constant 0 : index
    %c0_2 = arith.constant 0 : index
    %1 = vector.load %arg1[%c0_1, %c0_2] : memref<32x128xf32, #tpu.memory_space<vmem>>, vector<32x128xf32>
    %cst = arith.constant dense<0.000000e+00> : vector<2x128xf32>
    %2 = tpu.matmul %0, %1, %cst {dimension_numbers = #tpu.dot_dimension_numbers<[1], [0], [0], [1], [0, 0, 1, 1], [], []>} : vector<2x32xf32>, vector<32x128xf32>, vector<2x128xf32> -> vector<2x128xf32>
    %c0_3 = arith.constant 0 : index
    %c0_4 = arith.constant 0 : index
    %3 = vector.load %arg2[%c0_3, %c0_4] : memref<1x128xf32, #tpu.memory_space<vmem>>, vector<1x128xf32>
    %4 = vector.broadcast %3 : vector<1x128xf32> to vector<2x128xf32>
    %5 = arith.addf %2, %4 : vector<2x128xf32>
    %cst_5 = arith.constant 0.000000e+00 : f32
    %6 = vector.broadcast %cst_5 : f32 to vector<2x128xf32>
    %7 = arith.maximumf %5, %6 : vector<2x128xf32>
    %c0_6 = arith.constant 0 : index
    %c0_7 = arith.constant 0 : index
    %8 = vector.load %arg3[%c0_6, %c0_7] : memref<128x128xf32, #tpu.memory_space<vmem>>, vector<128x128xf32>
    %cst_8 = arith.constant dense<0.000000e+00> : vector<2x128xf32>
    %9 = tpu.matmul %7, %8, %cst_8 {dimension_numbers = #tpu.dot_dimension_numbers<[1], [0], [0], [1], [0, 0, 1, 1], [], []>} : vector<2x128xf32>, vector<128x128xf32>, vector<2x128xf32> -> vector<2x128xf32>
    %c0_9 = arith.constant 0 : index
    %c0_10 = arith.constant 0 : index
    %10 = vector.load %arg4[%c0_9, %c0_10] : memref<1x128xf32, #tpu.memory_space<vmem>>, vector<1x128xf32>
    %11 = vector.broadcast %10 : vector<1x128xf32> to vector<2x128xf32>
    %12 = arith.addf %9, %11 : vector<2x128xf32>
    %cst_11 = arith.constant 0.000000e+00 : f32
    %13 = vector.broadcast %cst_11 : f32 to vector<2x128xf32>
    %14 = arith.maximumf %12, %13 : vector<2x128xf32>
    %c0_12 = arith.constant 0 : index
    %c0_13 = arith.constant 0 : index
    %15 = vector.load %arg5[%c0_12, %c0_13] : memref<128x128xf32, #tpu.memory_space<vmem>>, vector<128x128xf32>
    %cst_14 = arith.constant dense<0.000000e+00> : vector<2x128xf32>
    %16 = tpu.matmul %14, %15, %cst_14 {dimension_numbers = #tpu.dot_dimension_numbers<[1], [0], [0], [1], [0, 0, 1, 1], [], []>} : vector<2x128xf32>, vector<128x128xf32>, vector<2x128xf32> -> vector<2x128xf32>
    %c0_15 = arith.constant 0 : index
    %c0_16 = arith.constant 0 : index
    %17 = vector.load %arg6[%c0_15, %c0_16] : memref<1x128xf32, #tpu.memory_space<vmem>>, vector<1x128xf32>
    %18 = vector.broadcast %17 : vector<1x128xf32> to vector<2x128xf32>
    %19 = arith.addf %16, %18 : vector<2x128xf32>
    %cst_17 = arith.constant 0.000000e+00 : f32
    %20 = vector.broadcast %cst_17 : f32 to vector<2x128xf32>
    %21 = arith.maximumf %19, %20 : vector<2x128xf32>
    %c0_18 = arith.constant 0 : index
    %c0_19 = arith.constant 0 : index
    %22 = vector.load %arg7[%c0_18, %c0_19] : memref<128x1xf32, #tpu.memory_space<vmem>>, vector<128x1xf32>
    %cst_20 = arith.constant dense<0.000000e+00> : vector<2x1xf32>
    %23 = tpu.matmul %21, %22, %cst_20 {dimension_numbers = #tpu.dot_dimension_numbers<[1], [0], [0], [1], [0, 0, 1, 1], [], []>} : vector<2x128xf32>, vector<128x1xf32>, vector<2x1xf32> -> vector<2x1xf32>
    %c0_21 = arith.constant 0 : index
    %c0_22 = arith.constant 0 : index
    %24 = vector.load %arg8[%c0_21, %c0_22] : memref<1x1xf32, #tpu.memory_space<vmem>>, vector<1x1xf32>
    %25 = vector.broadcast %24 : vector<1x1xf32> to vector<2x1xf32>
    %26 = arith.addf %23, %25 : vector<2x1xf32>
    %cst_23 = arith.constant 0.000000e+00 : f32
    %27 = vector.broadcast %cst_23 : f32 to vector<2x1xf32>
    %28 = arith.maximumf %26, %27 : vector<2x1xf32>
    %cst_24 = arith.constant 0.00999999977 : f32
    %cst_25 = arith.constant 1.000000e+02 : f32
    %29 = vector.broadcast %cst_24 : f32 to vector<2x1xf32>
    %30 = arith.maximumf %29, %28 : vector<2x1xf32>
    %31 = vector.broadcast %cst_25 : f32 to vector<2x1xf32>
    %32 = arith.minimumf %31, %30 : vector<2x1xf32>
    %c0_26 = arith.constant 0 : index
    %c0_27 = arith.constant 0 : index
    %33 = vector.load %arg9[%c0_26, %c0_27] : memref<2x1xf32, #tpu.memory_space<vmem>>, vector<2x1xf32>
    tpu.vector_store %arg9[%c0_26, %c0_27], %32 {strides = array<i32>} : memref<2x1xf32, #tpu.memory_space<vmem>>, vector<2x1xf32>,
    return
  }
}

</mosaic_0001>

<llo_original>
// kernel: tpu_custom_call.1
$region0: #{tpu_custom_call.1}
  #allocation0 [shape = 'u32[]', space=smem, size = 0x4, offset = 0x4, fixed_abs, tag = 'smem constant byte address 0x4 - core index']
  #allocation1 [shape = 'u32[72,128]{1,0:T(1,128)}', space=vmem, size = 0x9000, scoped, tag = 'internal scratch']
  #allocation2 [shape = 'f32[1,1]{1,0:T(1,128)S(1)}', space=vmem, size = 0x200, scoped, tag = 'scoped memory for tpu_custom_call.1']
  %s0 = inlined_call_operand.vmem [shape: f32[2,32], index: 0, kind: input, shape index: {}]
  %s1 = inlined_call_operand.hbm [shape: f32[32,128], index: 1, kind: input, shape index: {}]
  %s2 = inlined_call_operand.vmem [shape: f32[1,128], index: 2, kind: input, shape index: {}]
  %s3 = inlined_call_operand.vmem [shape: f32[128,128], index: 3, kind: input, shape index: {}]
  %s4 = inlined_call_operand.vmem [shape: f32[1,128], index: 4, kind: input, shape index: {}]
  %s5 = inlined_call_operand.hbm [shape: f32[128,128], index: 5, kind: input, shape index: {}]
  %s6 = inlined_call_operand.vmem [shape: f32[1,128], index: 6, kind: input, shape index: {}]
  %s7 = inlined_call_operand.vmem [shape: f32[128,1], index: 7, kind: input, shape index: {}]
  %s8 = inlined_call_operand.<no memory space> [shape: f32[1,1], index: 8, kind: input, shape index: {}]
  %s9 = inlined_call_operand.vmem [shape: f32[2,1], index: 9, kind: output, shape index: {}]
  %s10 = sld [smem:[#allocation0]]
  $region54: #{tpu_custom_call.1} parent=0
    _
  %s12 = ssub.s32 1, %s10
  %s13 = scalar_select 0, %s12, %s10
  %v14 = vstv %s8
  %15 = vst [vmem:[#allocation2] sm:$0x1] %v14
  $region1: #{tpu_custom_call.1} parent=0
    #allocation3 [shape = 'u8[16384]{0}', space=vmem, size = 0x4000, scoped, tag = 'input window, operand 1, single buffered']
    #allocation4 [shape = 's32[1]{0}', space=sflag, size = 0x4, scoped, tag = 'scoped memory for tpu_custom_call.1']
    #allocation5 [shape = 'u8[65536]{0}', space=vmem, size = 0x10000, scoped, tag = 'input window, operand 5, single buffered']
    #allocation6 [shape = 's32[1]{0}', space=sflag, size = 0x4, scoped, tag = 'scoped memory for tpu_custom_call.1']
    %16 = vsyncpa [#allocation4], 0
    %17 = vsyncpa [#allocation6], 0
    // Predicated region
    $region2: #{tpu_custom_call.1} parent=1 // pred_check
      _
    $region3: #{tpu_custom_call.1} parent=1 // pred_check_branch
      %19 = sbr.rel (0) target = $region5
    $region4: #{tpu_custom_call.1} parent=1 // pred_region
      _
    $region5: #{tpu_custom_call.1} parent=1 // pred_fallthru
      _
    // Predicated region
    $region6: #{tpu_custom_call.1} parent=1 // pred_check
      _
    $region7: #{tpu_custom_call.1} parent=1 // pred_check_branch
      %21 = sbr.rel (0) target = $region9
    $region8: #{tpu_custom_call.1} parent=1 // pred_region
      %23 = vsyncadd [#allocation4], 0
      %s24 = sshll.u32 %s1, 4
      %s25 = int_to_ptr.hbm [resolvable:$true] %s24
      %s26 = sshll.u32 [#allocation3], 4
      %s27 = int_to_ptr.vmem [resolvable:$true] %s26
      %32 = dma.hbm_to_vmem [thread:$0]  %s25, 512, %s27, [#allocation4], 128, 128, 8
    $region9: #{tpu_custom_call.1} parent=1 // pred_fallthru
      _
    // Predicated region
    $region10: #{tpu_custom_call.1} parent=1 // pred_check
      _
    $region11: #{tpu_custom_call.1} parent=1 // pred_check_branch
      %34 = sbr.rel (0) target = $region13
    $region12: #{tpu_custom_call.1} parent=1 // pred_region
      _
    $region13: #{tpu_custom_call.1} parent=1 // pred_fallthru
      _
    // Predicated region
    $region14: #{tpu_custom_call.1} parent=1 // pred_check
      _
    $region15: #{tpu_custom_call.1} parent=1 // pred_check_branch
      %36 = sbr.rel (0) target = $region17
    $region16: #{tpu_custom_call.1} parent=1 // pred_region
      _
    $region17: #{tpu_custom_call.1} parent=1 // pred_fallthru
      _
    // Predicated region
    $region18: #{tpu_custom_call.1} parent=1 // pred_check
      _
    $region19: #{tpu_custom_call.1} parent=1 // pred_check_branch
      %38 = sbr.rel (0) target = $region21
    $region20: #{tpu_custom_call.1} parent=1 // pred_region
      _
    $region21: #{tpu_custom_call.1} parent=1 // pred_fallthru
      _
    // Predicated region
    $region22: #{tpu_custom_call.1} parent=1 // pred_check
      _
    $region23: #{tpu_custom_call.1} parent=1 // pred_check_branch
      %40 = sbr.rel (0) target = $region25
    $region24: #{tpu_custom_call.1} parent=1 // pred_region
      %42 = vsyncadd [#allocation6], 0
      %s43 = sshll.u32 %s5, 4
      %s44 = int_to_ptr.hbm [resolvable:$true] %s43
      %s45 = sshll.u32 [#allocation5], 4
      %s46 = int_to_ptr.vmem [resolvable:$true] %s45
      %51 = dma.hbm_to_vmem [thread:$0]  %s44, 2048, %s46, [#allocation6], 128, 128, 8
    $region25: #{tpu_custom_call.1} parent=1 // pred_fallthru
      _
    // Predicated region
    $region26: #{tpu_custom_call.1} parent=1 // pred_check
      _
    $region27: #{tpu_custom_call.1} parent=1 // pred_check_branch
      %53 = sbr.rel (0) target = $region29
    $region28: #{tpu_custom_call.1} parent=1 // pred_region
      _
    $region29: #{tpu_custom_call.1} parent=1 // pred_fallthru
      _
    // Predicated region
    $region30: #{tpu_custom_call.1} parent=1 // pred_check
      _
    $region31: #{tpu_custom_call.1} parent=1 // pred_check_branch
      %55 = sbr.rel (0) target = $region33
    $region32: #{tpu_custom_call.1} parent=1 // pred_region
      _
    $region33: #{tpu_custom_call.1} parent=1 // pred_fallthru
      _
    // Predicated region
    $region34: #{tpu_custom_call.1} parent=1 // pred_check
      _
    $region35: #{tpu_custom_call.1} parent=1 // pred_check_branch
      %57 = sbr.rel (0) target = $region37
    $region36: #{tpu_custom_call.1} parent=1 // pred_region
      _
    $region37: #{tpu_custom_call.1} parent=1 // pred_fallthru
      _
    // Predicated region
    $region38: #{tpu_custom_call.1} parent=1 // pred_check
      _
    $region39: #{tpu_custom_call.1} parent=1 // pred_check_branch
      %59 = sbr.rel (0) target = $region41
    $region40: #{tpu_custom_call.1} parent=1 // pred_region
      %61 = dma.done [#allocation4], 512
    $region41: #{tpu_custom_call.1} parent=1 // pred_fallthru
      _
    // Predicated region
    $region42: #{tpu_custom_call.1} parent=1 // pred_check
      _
    $region43: #{tpu_custom_call.1} parent=1 // pred_check_branch
      %63 = sbr.rel (0) target = $region45
    $region44: #{tpu_custom_call.1} parent=1 // pred_region
      %65 = dma.done [#allocation6], 2048
    $region45: #{tpu_custom_call.1} parent=1 // pred_fallthru
      _
    %v66 = vld [vmem:[%s0] sm:$0x3]
    %v67 = vld [vmem:[#allocation3] sm:$0xff]
    %v68 = vld [vmem:[#allocation3 + $0x8] sm:$0xff]
    %v69 = vld [vmem:[#allocation3 + $0x10] sm:$0xff]
    %v70 = vld [vmem:[#allocation3 + $0x18] sm:$0xff]
    %v71 = vld [vmem:[%s2] sm:$0x1]
    %v73 = vperm.slane %v71, 0
    %vm75 = vcmask 261120
    %v77 = vsel %vm75, %v66, 0
    %79 = vmatpush.msra.mxu0 0.0
    %80 = vmatpush.msra.mxu0 0.0
    %81 = vmatpush.msra.mxu0 0.0
    %82 = vmatpush.msra.mxu0 0.0
    %83 = vmatpush.msra.mxu0 0.0
    %84 = vmatpush.msra.mxu0 0.0
    %85 = vmatpush.msra.mxu0 0.0
    %86 = vmatpush.msra.mxu0 0.0
    %87 = vmatpush.msra.mxu0 0.0
    %88 = vmatpush.msra.mxu0 0.0
    %89 = vmatpush.msra.mxu0 0.0
    %90 = vmatpush.msra.mxu0 0.0
    %91 = vmatpush.msra.mxu0 %v70
    %92 = vmatpush.msra.mxu0 %v69
    %93 = vmatpush.msra.mxu0 %v68
    %94 = vmatpush.msra.mxu0 %v67
    %95 = vmatmul.f32.gmra.mxu0 %v77
    %v96 = vpop.f32.mrf.mxu0
    %v97 = vadd.f32 %v73, %v96
    %98 = vdwg.mxu0
    %v99 = vmax.f32 %v97, 0.0
    %v100 = vld [vmem:[%s3] sm:$0xff]
    %v101 = vld [vmem:[%s3 + $0x8] sm:$0xff]
    %v102 = vld [vmem:[%s3 + $0x10] sm:$0xff]
    %v103 = vld [vmem:[%s3 + $0x18] sm:$0xff]
    %v104 = vld [vmem:[%s3 + $0x20] sm:$0xff]
    %v105 = vld [vmem:[%s3 + $0x28] sm:$0xff]
    %v106 = vld [vmem:[%s3 + $0x30] sm:$0xff]
    %v107 = vld [vmem:[%s3 + $0x38] sm:$0xff]
    %v108 = vld [vmem:[%s3 + $0x40] sm:$0xff]
    %v109 = vld [vmem:[%s3 + $0x48] sm:$0xff]
    %v110 = vld [vmem:[%s3 + $0x50] sm:$0xff]
    %v111 = vld [vmem:[%s3 + $0x58] sm:$0xff]
    %v112 = vld [vmem:[%s3 + $0x60] sm:$0xff]
    %v113 = vld [vmem:[%s3 + $0x68] sm:$0xff]
    %v114 = vld [vmem:[%s3 + $0x70] sm:$0xff]
    %v115 = vld [vmem:[%s3 + $0x78] sm:$0xff]
    %v116 = vld [vmem:[%s4] sm:$0x1]
    %v118 = vperm.slane %v116, 0
    %120 = vmatpush.msra.mxu0 %v115
    %121 = vmatpush.msra.mxu0 %v114
    %122 = vmatpush.msra.mxu0 %v113
    %123 = vmatpush.msra.mxu0 %v112
    %124 = vmatpush.msra.mxu0 %v111
    %125 = vmatpush.msra.mxu0 %v110
    %126 = vmatpush.msra.mxu0 %v109
    %127 = vmatpush.msra.mxu0 %v108
    %128 = vmatpush.msra.mxu0 %v107
    %129 = vmatpush.msra.mxu0 %v106
    %130 = vmatpush.msra.mxu0 %v105
    %131 = vmatpush.msra.mxu0 %v104
    %132 = vmatpush.msra.mxu0 %v103
    %133 = vmatpush.msra.mxu0 %v102
    %134 = vmatpush.msra.mxu0 %v101
    %135 = vmatpush.msra.mxu0 %v100
    %136 = vmatmul.f32.gmra.mxu0 %v99
    %v137 = vpop.f32.mrf.mxu0
    %v138 = vadd.f32 %v118, %v137
    %139 = vdwg.mxu0
    %v140 = vmax.f32 %v138, 0.0
    %v141 = vld [vmem:[#allocation5] sm:$0xff]
    %v142 = vld [vmem:[#allocation5 + $0x8] sm:$0xff]
    %v143 = vld [vmem:[#allocation5 + $0x10] sm:$0xff]
    %v144 = vld [vmem:[#allocation5 + $0x18] sm:$0xff]
    %v145 = vld [vmem:[#allocation5 + $0x20] sm:$0xff]
    %v146 = vld [vmem:[#allocation5 + $0x28] sm:$0xff]
    %v147 = vld [vmem:[#allocation5 + $0x30] sm:$0xff]
    %v148 = vld [vmem:[#allocation5 + $0x38] sm:$0xff]
    %v149 = vld [vmem:[#allocation5 + $0x40] sm:$0xff]
    %v150 = vld [vmem:[#allocation5 + $0x48] sm:$0xff]
    %v151 = vld [vmem:[#allocation5 + $0x50] sm:$0xff]
    %v152 = vld [vmem:[#allocation5 + $0x58] sm:$0xff]
    %v153 = vld [vmem:[#allocation5 + $0x60] sm:$0xff]
    %v154 = vld [vmem:[#allocation5 + $0x68] sm:$0xff]
    %v155 = vld [vmem:[#allocation5 + $0x70] sm:$0xff]
    %v156 = vld [vmem:[#allocation5 + $0x78] sm:$0xff]
    %v157 = vld [vmem:[%s6] sm:$0x1]
    %v159 = vperm.slane %v157, 0
    %161 = vmatpush.msra.mxu0 %v156
    %162 = vmatpush.msra.mxu0 %v155
    %163 = vmatpush.msra.mxu0 %v154
    %164 = vmatpush.msra.mxu0 %v153
    %165 = vmatpush.msra.mxu0 %v152
    %166 = vmatpush.msra.mxu0 %v151
    %167 = vmatpush.msra.mxu0 %v150
    %168 = vmatpush.msra.mxu0 %v149
    %169 = vmatpush.msra.mxu0 %v148
    %170 = vmatpush.msra.mxu0 %v147
    %171 = vmatpush.msra.mxu0 %v146
    %172 = vmatpush.msra.mxu0 %v145
    %173 = vmatpush.msra.mxu0 %v144
    %174 = vmatpush.msra.mxu0 %v143
    %175 = vmatpush.msra.mxu0 %v142
    %176 = vmatpush.msra.mxu0 %v141
    %177 = vmatmul.f32.gmra.mxu0 %v140
    %v178 = vpop.f32.mrf.mxu0
    %v179 = vadd.f32 %v159, %v178
    %180 = vdwg.mxu0
    %v181 = vmax.f32 %v179, 0.0
    %v182 = vld [vmem:[%s7] sm:$0xff]
    %v183 = vld [vmem:[%s7 + $0x8] sm:$0xff]
    %v184 = vld [vmem:[%s7 + $0x10] sm:$0xff]
    %v185 = vld [vmem:[%s7 + $0x18] sm:$0xff]
    %v186 = vld [vmem:[%s7 + $0x20] sm:$0xff]
    %v187 = vld [vmem:[%s7 + $0x28] sm:$0xff]
    %v188 = vld [vmem:[%s7 + $0x30] sm:$0xff]
    %v189 = vld [vmem:[%s7 + $0x38] sm:$0xff]
    %v190 = vld [vmem:[%s7 + $0x40] sm:$0xff]
    %v191 = vld [vmem:[%s7 + $0x48] sm:$0xff]
    %v192 = vld [vmem:[%s7 + $0x50] sm:$0xff]
    %v193 = vld [vmem:[%s7 + $0x58] sm:$0xff]
    %v194 = vld [vmem:[%s7 + $0x60] sm:$0xff]
    %v195 = vld [vmem:[%s7 + $0x68] sm:$0xff]
    %v196 = vld [vmem:[%s7 + $0x70] sm:$0xff]
    %v197 = vld [vmem:[%s7 + $0x78] sm:$0xff]
    %v198 = vld [vmem:[#allocation2] sm:$0x1]
    %v200 = vperm.slane %v198, 0
    %202 = vmatpush.msra.mxu0 %v197
    %203 = vmatpush.msra.mxu0 %v196
    %204 = vmatpush.msra.mxu0 %v195
    %205 = vmatpush.msra.mxu0 %v194
    %206 = vmatpush.msra.mxu0 %v193
    %207 = vmatpush.msra.mxu0 %v192
    %208 = vmatpush.msra.mxu0 %v191
    %209 = vmatpush.msra.mxu0 %v190
    %210 = vmatpush.msra.mxu0 %v189
    %211 = vmatpush.msra.mxu0 %v188
    %212 = vmatpush.msra.mxu0 %v187
    %213 = vmatpush.msra.mxu0 %v186
    %214 = vmatpush.msra.mxu0 %v185
    %215 = vmatpush.msra.mxu0 %v184
    %216 = vmatpush.msra.mxu0 %v183
    %217 = vmatpush.msra.mxu0 %v182
    %218 = vmatmul.f32.gmra.mxu0 %v181
    %v219 = vpop.f32.mrf.mxu0
    %v220 = vadd.f32 %v200, %v219
    %221 = vdwg.mxu0
    %v222 = vmax.f32 %v220, 0.0
    %v223 = vmax.f32 %v222, 0.01
    %v224 = vmin.f32 %v223, 100.0
    %vm225 = vcmask 1024
    %226 = vst.msk [vmem:[%s9] sm:$0x3] %vm225, %v224
    // Predicated region
    $region46: #{tpu_custom_call.1} parent=1 // pred_check
      _
    $region47: #{tpu_custom_call.1} parent=1 // pred_check_branch
      %228 = sbr.rel (0) target = $region49
    $region48: #{tpu_custom_call.1} parent=1 // pred_region
      _
    $region49: #{tpu_custom_call.1} parent=1 // pred_fallthru
      _
    // Predicated region
    $region50: #{tpu_custom_call.1} parent=1 // pred_check
      _
    $region51: #{tpu_custom_call.1} parent=1 // pred_check_branch
      %230 = sbr.rel (0) target = $region53
    $region52: #{tpu_custom_call.1} parent=1 // pred_region
      _
    $region53: #{tpu_custom_call.1} parent=1 // pred_fallthru
      _
    %231 = vsyncpa [#allocation4], 1
    %232 = vsyncpa [#allocation6], 1

</llo_original>
